<compile_context>
chip_gen: v7x
topology: tpu7x:2x2x1
jax: 0.10.0
libtpu: 0.0.40
codegen_flags: <defaults>
</compile_context>

<pallas_src>
import functools

import jax
import jax.numpy as jnp
from jax.experimental import pallas as pl
from jax.experimental.pallas import tpu as pltpu


# ----------------------------- fused MLP kernel ------------------------------
def _fused_mlp_kernel(x_ref, wgu_ref, w2_ref, o_ref, acc_ref, *, block_i):
    """One (split, token-tile, intermediate-tile) step of the fused MLP.

    gu   = x_tile @ [Wg_blk | Wu_blk]    (single MXU pass, f32 accumulate)
    act  = silu(gate) * up               (f32 elementwise, VPU/EUP)
    acc += act @ W2_blk                  (MXU, f32 accumulate in VMEM scratch)
    """
    j = pl.program_id(2)  # intermediate (reduction) axis — last grid axis

    @pl.when(j == 0)
    def _init():
        acc_ref[...] = jnp.zeros_like(acc_ref)

    x = x_ref[...]
    gu = jnp.dot(x, wgu_ref[...], preferred_element_type=jnp.float32)
    gate = gu[:, :block_i]          # static lane-aligned slices (bi % 128 == 0)
    up = gu[:, block_i:]
    act = gate * jax.nn.sigmoid(gate) * up      # f32 math (no bf16 VPU needed)
    acc_ref[...] += jnp.dot(
        act.astype(w2_ref.dtype), w2_ref[...], preferred_element_type=jnp.float32
    )

    @pl.when(j == pl.num_programs(2) - 1)
    def _flush():
        o_ref[...] = acc_ref[...].astype(o_ref.dtype)


# ----------------------------- helpers ---------------------------------------
def _round_up(x, m):
    return (x + m - 1) // m * m


def _tpu_generation():
    try:
        kind = jax.devices()[0].device_kind.lower()
    except Exception:
        return None
    for tag in ("v7", "v6", "v5"):
        if tag in kind:
            return tag
    return None


# ----------------------------- wrapper ---------------------------------------
def internlm2_mlp(x, w_gate, w_up, w2, *, block_m=None, block_i=None,
                  n_split=None):
    """Fused InternLM2MLP.forward: (silu(x@Wg) * (x@Wu)) @ W2.

    x:        [..., H]   (leading dims flattened to the token axis)
    w_gate:   [H, I]     (gate half of gate_up_proj, stored [in, out])
    w_up:     [H, I]     (up half of gate_up_proj)
    w2:       [I, H]     (down projection)
    """
    orig_shape = x.shape
    H = orig_shape[-1]
    x2d = x.reshape(-1, H)
    M = x2d.shape[0]
    I = w_gate.shape[1]
    assert w_gate.shape == (H, I) and w_up.shape == (H, I) and w2.shape == (I, H)

    gen = _tpu_generation()
    if block_m is None:
        block_m = {"v5": 256, "v6": 1024, "v7": 512}.get(gen, 512)
    if block_i is None:
        block_i = 512

    # ---- tile selection (never fall back to full-dim tiles; pad instead) ----
    bm = max(16, _round_up(min(block_m, M), 16))            # bf16 sublane = 16
    bi = max(128, (min(block_i, _round_up(I, 128)) // 128) * 128)
    if I >= 256:
        bi = max(bi, 256)                                    # keep 256x256 MXU full

    dsize = jnp.dtype(x.dtype).itemsize
    # VMEM cap per generation (leave headroom under physical: 128 MiB / 64 MiB)
    cap = (56 << 20) if gen == "v7" else (110 << 20)

    def _vmem_need(bm_, bi_):
        # double-buffered tiles (x, gate_up weight, W2, out) + f32 accumulator
        tile = (bm_ * H + H * 2 * bi_ + bi_ * H + bm_ * H) * dsize
        return 2 * tile + bm_ * H * 4

    while _vmem_need(bm, bi) > cap and bm > 128:
        bm = max(128, bm // 2)
    while _vmem_need(bm, bi) > cap and bi > 256:
        bi = max(256, bi // 2)

    M_pad = _round_up(M, bm)
    I_pad = _round_up(I, bi)
    nI = I_pad // bi

    # Decode path: split the intermediate reduction across TensorCores (v7x)
    # when the token axis has a single tile; partials are summed afterwards.
    if n_split is None:
        n_split = 2 if (gen == "v7" and M_pad == bm and nI >= 2 and nI % 2 == 0) else 1
    if n_split < 1 or nI % n_split != 0:
        n_split = 1
    nI_per = nI // n_split

    vmem_limit = int(min(cap, max(_vmem_need(bm, bi) * 1.2 + (2 << 20), 32 << 20)))

    # ---- pad operands & build per-tile interleaved gate_up weight -----------
    # TODO(synk): in a real deployment pre-pack [Wg|Wu] (and padding) once at
    # weight-load time instead of per call.
    xp = x2d if M_pad == M else jnp.pad(x2d, ((0, M_pad - M), (0, 0)))
    wg_p = w_gate if I_pad == I else jnp.pad(w_gate, ((0, 0), (0, I_pad - I)))
    wu_p = w_up if I_pad == I else jnp.pad(w_up, ((0, 0), (0, I_pad - I)))
    w2_p = w2 if I_pad == I else jnp.pad(w2, ((0, I_pad - I), (0, 0)))
    # layout: [gate_blk0 | up_blk0 | gate_blk1 | up_blk1 | ...], each blk bi wide
    wgu = jnp.concatenate(
        [wg_p.reshape(H, nI, bi), wu_p.reshape(H, nI, bi)], axis=2
    ).reshape(H, 2 * I_pad)

    grid = (n_split, M_pad // bm, nI_per)  # reduction axis LAST
    out_dtype = x.dtype if n_split == 1 else jnp.float32

    # ---- cost estimate (real HBM traffic: weights re-streamed M/bm times) ---
    flops = 6 * M_pad * H * I_pad
    weight_bytes = (H * 2 * I_pad + I_pad * H) * dsize
    bytes_accessed = 2 * M_pad * H * dsize + (M_pad // bm) * weight_bytes

    out_parts = pl.pallas_call(
        functools.partial(_fused_mlp_kernel, block_i=bi),
        out_shape=jax.ShapeDtypeStruct((n_split, M_pad, H), out_dtype),
        grid_spec=pltpu.PrefetchScalarGridSpec(
            num_scalar_prefetch=0,
            grid=grid,
            in_specs=[
                pl.BlockSpec((bm, H), lambda s, i, j: (i, 0)),              # x
                pl.BlockSpec((H, 2 * bi),
                             lambda s, i, j: (0, s * nI_per + j)),          # [Wg|Wu]
                pl.BlockSpec((bi, H),
                             lambda s, i, j: (s * nI_per + j, 0)),          # W2
            ],
            out_specs=pl.BlockSpec((None, bm, H), lambda s, i, j: (s, i, 0)),
            scratch_shapes=[pltpu.VMEM((bm, H), jnp.float32)],   # f32 accumulator
        ),
        compiler_params=pltpu.CompilerParams(
            dimension_semantics=("parallel", "parallel", "arbitrary"),
            vmem_limit_bytes=vmem_limit,
        ),
        cost_estimate=pl.CostEstimate(
            flops=flops, transcendentals=M_pad * I_pad,
            bytes_accessed=bytes_accessed,
        ),
    )(xp, wgu, w2_p)

    if n_split == 1:
        out2d = out_parts[0]
    else:
        out2d = jnp.sum(out_parts, axis=0).astype(x.dtype)  # cheap: only M x H

    return out2d[:M].reshape(*orig_shape[:-1], H)
    # TODO(synk): tensor-parallel sharding / quantization of build_gateup_linear
    # (is_tp / quant_config) is not modeled; single-device dense weights only.


# ----------------------------- main ------------------------------------------
if __name__ == "__main__":
    key = jax.random.PRNGKey(0)
    kx, kg, ku, kd, kx2 = jax.random.split(key, 5)

    DTYPE = jnp.bfloat16  # bf16 storage, f32 accumulate inside the kernel

    # Small shapes consistent with the module.  M = 2*15 = 30 pads to 32 (two
    # bm=16 token tiles); I = 384 pads to 512 (two bi=256 intermediate blocks),
    # exercising padding, the token axis, and the reduction accumulator.
    B, S, H, I = 2, 15, 256, 384

    x = jax.random.normal(kx, (B, S, H), jnp.float32).astype(DTYPE)
    w_gate = (jax.random.normal(kg, (H, I), jnp.float32) / jnp.sqrt(H)).astype(DTYPE)
    w_up = (jax.random.normal(ku, (H, I), jnp.float32) / jnp.sqrt(H)).astype(DTYPE)
    w2 = (jax.random.normal(kd, (I, H), jnp.float32) / jnp.sqrt(I)).astype(DTYPE)

    def ref_mlp(xx):
        xf = xx.reshape(-1, H).astype(jnp.float32)
        g = xf @ w_gate.astype(jnp.float32)
        u = xf @ w_up.astype(jnp.float32)
        o = (g * jax.nn.sigmoid(g) * u) @ w2.astype(jnp.float32)
        return o.reshape(*xx.shape[:-1], H)

    # --- prefill-like path: grid (1, 2, 2) ---
    out = internlm2_mlp(x, w_gate, w_up, w2, block_m=16, block_i=256)
    out = jax.block_until_ready(out)
    ref = ref_mlp(x)
    err = float(jnp.max(jnp.abs(out.astype(jnp.float32) - ref)))
    assert out.shape == (B, S, H)
    assert bool(jnp.all(jnp.isfinite(out)))
    assert err < 0.1, f"prefill max abs err {err}"

    # --- decode-like path: 2 tokens, forced 2-way intermediate split ---
    xd = jax.random.normal(kx2, (2, 1, H), jnp.float32).astype(DTYPE)
    outd = internlm2_mlp(xd, w_gate, w_up, w2, block_m=16, block_i=256, n_split=2)
    outd = jax.block_until_ready(outd)
    refd = ref_mlp(xd)
    errd = float(jnp.max(jnp.abs(outd.astype(jnp.float32) - refd)))
    assert outd.shape == (2, 1, H)
    assert bool(jnp.all(jnp.isfinite(outd)))
    assert errd < 0.1, f"decode max abs err {errd}"

    print("KERNEL_OK")
</pallas_src>

<mosaic_0001>
module attributes {stable_mosaic.version = 11 : i64} {
  func.func @_fused_mlp_kernel(%arg0: i32, %arg1: i32, %arg2: i32, %arg3: memref<16x256xbf16, #tpu.memory_space<vmem>>, %arg4: memref<256x512xbf16, #tpu.memory_space<vmem>>, %arg5: memref<256x256xbf16, #tpu.memory_space<vmem>>, %arg6: memref<1x16x256xbf16, #tpu.memory_space<vmem>>, %arg7: memref<16x256xf32, #tpu.memory_space<vmem>>) attributes {dimension_semantics = [#tpu.dimension_semantics<parallel>, #tpu.dimension_semantics<parallel>, #tpu.dimension_semantics<arbitrary>], iteration_bounds = array<i64: 1, 2, 2>, scalar_prefetch = 0 : i64, scratch_operands = 1 : i64, tpu.core_type = #tpu.core_type<tc>, window_params = [{transform_indices = @transform_0, window_bounds = array<i64: 16, 256>}, {transform_indices = @transform_1, window_bounds = array<i64: 256, 512>}, {transform_indices = @transform_2, window_bounds = array<i64: 256, 256>}, {transform_indices = @transform_3, window_bounds = array<i64: 1, 16, 256>}]} {
    %c0_i32 = arith.constant 0 : i32
    %0 = arith.cmpi eq, %arg2, %c0_i32 : i32
    %1 = arith.extui %0 : i1 to i32
    %c0_i32_0 = arith.constant 0 : i32
    %2 = arith.cmpi ne, %1, %c0_i32_0 : i32
    scf.if %2 {
      %cst_13 = arith.constant 0.000000e+00 : f32
      %24 = vector.broadcast %cst_13 : f32 to vector<16x256xf32>
      %c0_14 = arith.constant 0 : index
      %c0_15 = arith.constant 0 : index
      %25 = vector.load %arg7[%c0_14, %c0_15] : memref<16x256xf32, #tpu.memory_space<vmem>>, vector<16x256xf32>
      tpu.vector_store %arg7[%c0_14, %c0_15], %24 {strides = array<i32>} : memref<16x256xf32, #tpu.memory_space<vmem>>, vector<16x256xf32>,
    } else {
    }
    %c0 = arith.constant 0 : index
    %c0_1 = arith.constant 0 : index
    %3 = vector.load %arg3[%c0, %c0_1] : memref<16x256xbf16, #tpu.memory_space<vmem>>, vector<16x256xbf16>
    %c0_2 = arith.constant 0 : index
    %c0_3 = arith.constant 0 : index
    %4 = vector.load %arg4[%c0_2, %c0_3] : memref<256x512xbf16, #tpu.memory_space<vmem>>, vector<256x512xbf16>
    %cst = arith.constant dense<0.000000e+00> : vector<16x512xf32>
    %5 = tpu.matmul %3, %4, %cst {dimension_numbers = #tpu.dot_dimension_numbers<[1], [0], [0], [1], [0, 0, 1, 1], [], []>} : vector<16x256xbf16>, vector<256x512xbf16>, vector<16x512xf32> -> vector<16x512xf32>
    %6 = vector.extract_strided_slice %5 {offsets = [0, 0], sizes = [16, 256], strides = [1, 1]} : vector<16x512xf32> to vector<16x256xf32>
    %7 = vector.extract_strided_slice %5 {offsets = [0, 256], sizes = [16, 256], strides = [1, 1]} : vector<16x512xf32> to vector<16x256xf32>
    %8 = arith.negf %6 : vector<16x256xf32>
    %9 = math.exp %8 : vector<16x256xf32>
    %cst_4 = arith.constant 1.000000e+00 : f32
    %10 = vector.broadcast %cst_4 : f32 to vector<16x256xf32>
    %11 = arith.addf %10, %9 : vector<16x256xf32>
    %12 = arith.divf %10, %11 : vector<16x256xf32>
    %13 = arith.mulf %6, %12 : vector<16x256xf32>
    %14 = arith.mulf %13, %7 : vector<16x256xf32>
    %c0_5 = arith.constant 0 : index
    %c0_6 = arith.constant 0 : index
    %15 = vector.load %arg7[%c0_5, %c0_6] : memref<16x256xf32, #tpu.memory_space<vmem>>, vector<16x256xf32>
    %16 = arith.truncf %14 : vector<16x256xf32> to vector<16x256xbf16>
    %c0_7 = arith.constant 0 : index
    %c0_8 = arith.constant 0 : index
    %17 = vector.load %arg5[%c0_7, %c0_8] : memref<256x256xbf16, #tpu.memory_space<vmem>>, vector<256x256xbf16>
    %cst_9 = arith.constant dense<0.000000e+00> : vector<16x256xf32>
    %18 = tpu.matmul %16, %17, %cst_9 {dimension_numbers = #tpu.dot_dimension_numbers<[1], [0], [0], [1], [0, 0, 1, 1], [], []>} : vector<16x256xbf16>, vector<256x256xbf16>, vector<16x256xf32> -> vector<16x256xf32>
    %19 = arith.addf %15, %18 : vector<16x256xf32>
    %c0_10 = arith.constant 0 : index
    %c0_11 = arith.constant 0 : index
    %20 = vector.load %arg7[%c0_10, %c0_11] : memref<16x256xf32, #tpu.memory_space<vmem>>, vector<16x256xf32>
    tpu.vector_store %arg7[%c0_10, %c0_11], %19 {strides = array<i32>} : memref<16x256xf32, #tpu.memory_space<vmem>>, vector<16x256xf32>,
    %c1_i32 = arith.constant 1 : i32
    %21 = arith.cmpi eq, %arg2, %c1_i32 : i32
    %22 = arith.extui %21 : i1 to i32
    %c0_i32_12 = arith.constant 0 : i32
    %23 = arith.cmpi ne, %22, %c0_i32_12 : i32
    scf.if %23 {
      %c0_13 = arith.constant 0 : index
      %c0_14 = arith.constant 0 : index
      %24 = vector.load %arg7[%c0_13, %c0_14] : memref<16x256xf32, #tpu.memory_space<vmem>>, vector<16x256xf32>
      %25 = arith.truncf %24 : vector<16x256xf32> to vector<16x256xbf16>
      %c0_15 = arith.constant 0 : index
      %c0_16 = arith.constant 0 : index
      %c0_17 = arith.constant 0 : index
      %26 = vector.load %arg6[%c0_15, %c0_16, %c0_17] : memref<1x16x256xbf16, #tpu.memory_space<vmem>>, vector<1x16x256xbf16>
      %27 = vector.shape_cast %26 : vector<1x16x256xbf16> to vector<16x256xbf16>
      %28 = vector.shape_cast %25 : vector<16x256xbf16> to vector<1x16x256xbf16>
      tpu.vector_store %arg6[%c0_15, %c0_16, %c0_17], %28 {strides = array<i32>} : memref<1x16x256xbf16, #tpu.memory_space<vmem>>, vector<1x16x256xbf16>,
    } else {
    }
    return
  }
  func.func @transform_0(%arg0: i32, %arg1: i32, %arg2: i32) -> (i32, i32) {
    %c0_i32 = arith.constant 0 : i32
    %c0_i32_0 = arith.constant 0 : i32
    return %arg1, %c0_i32 : i32, i32
  }
  func.func @transform_1(%arg0: i32, %arg1: i32, %arg2: i32) -> (i32, i32) {
    %c2_i32 = arith.constant 2 : i32
    %0 = arith.muli %arg0, %c2_i32 : i32
    %1 = arith.addi %0, %arg2 : i32
    %c0_i32 = arith.constant 0 : i32
    %c0_i32_0 = arith.constant 0 : i32
    return %c0_i32, %1 : i32, i32
  }
  func.func @transform_2(%arg0: i32, %arg1: i32, %arg2: i32) -> (i32, i32) {
    %c2_i32 = arith.constant 2 : i32
    %0 = arith.muli %arg0, %c2_i32 : i32
    %1 = arith.addi %0, %arg2 : i32
    %c0_i32 = arith.constant 0 : i32
    %c0_i32_0 = arith.constant 0 : i32
    return %1, %c0_i32 : i32, i32
  }
  func.func @transform_3(%arg0: i32, %arg1: i32, %arg2: i32) -> (i32, i32, i32) {
    %c0_i32 = arith.constant 0 : i32
    %c0_i32_0 = arith.constant 0 : i32
    return %arg0, %arg1, %c0_i32 : i32, i32, i32
  }
}

</mosaic_0001>

<llo_original>
// kernel: tpu_custom_call.1
$region0: #{tpu_custom_call.1}
  #allocation0 [shape = 'u32[]', space=smem, size = 0x4, offset = 0x4, fixed_abs, tag = 'smem constant byte address 0x4 - core index']
  #allocation1 [shape = 'u32[144,128]{1,0:T(1,128)}', space=vmem, size = 0x12000, scoped, tag = 'internal scratch']
  #allocation2 [shape = 'f32[16,256]{1,0:T(8,128)}', space=vmem, size = 0x4000, scoped, tag = 'scratch operand']
  %s0 = inlined_call_operand.hbm [shape: bf16[32,256], index: 0, kind: input, shape index: {}]
  %s1 = inlined_call_operand.hbm [shape: bf16[256,1024], index: 1, kind: input, shape index: {}]
  %s2 = inlined_call_operand.hbm [shape: bf16[512,256], index: 2, kind: input, shape index: {}]
  %s3 = inlined_call_operand.hbm [shape: bf16[1,32,256], index: 3, kind: output, shape index: {}]
  %s4 = sld [smem:[#allocation0]]
  $region65: #{tpu_custom_call.1} parent=0
    _
  %s6 = ssub.s32 1, %s4
  %s7 = scalar_select 0, %s6, %s4
  $region1: #{tpu_custom_call.1} parent=0
    #allocation3 [shape = 'u8[16384]{0}', space=vmem, size = 0x4000, scoped, tag = 'input window, operand 0']
    #allocation4 [shape = 's32[2]{0}', space=sflag, size = 0x8, scoped, tag = 'scoped memory for tpu_custom_call.1']
    #allocation5 [shape = 's32[2]{0}', space=sflag, size = 0x8, scoped, tag = 'scoped memory for tpu_custom_call.1']
    #allocation6 [shape = 'u8[524288]{0}', space=vmem, size = 0x80000, scoped, tag = 'input window, operand 1']
    #allocation7 [shape = 's32[2]{0}', space=sflag, size = 0x8, scoped, tag = 'scoped memory for tpu_custom_call.1']
    #allocation8 [shape = 'u8[262144]{0}', space=vmem, size = 0x40000, scoped, tag = 'input window, operand 2']
    #allocation9 [shape = 'u8[16384]{0}', space=vmem, size = 0x4000, scoped, tag = 'output window, operand 0']
    %8 = vsyncpa [#allocation4], 0
    %s9 = scalar_lea.sflag [#allocation4], 1
    %10 = vsyncpa %s9, 0
    %11 = vsyncpa [#allocation7], 0
    %s12 = scalar_lea.sflag [#allocation7], 1
    %13 = vsyncpa %s12, 0
    %14 = vsyncpa [#allocation5], 0
    %s15 = scalar_lea.sflag [#allocation5], 1
    %16 = vsyncpa %s15, 0
    loop: start=0, step=1, limit=6
    $region2: #{tpu_custom_call.1} parent=1 // loop_pre_header
      _
    $region3: #{tpu_custom_call.1} parent=1 // loop_header
      %s18 = sphi 0, %s22
      %p19 = scmp.ge.s32.totalorder %s18, 6
      %s25 = sphi 0, %s44
      %s26 = sphi 0, %s40
      %s27 = sphi 0, %s36
      %s28 = sphi 0, %s25
      %s29 = sphi 0, %s26
      %s30 = sphi 0, %s27
      %s31 = sphi 0, %s28
      %s32 = sphi 0, %s29
      %s33 = sphi 0, %s30
      %s47 = sphi 0, %s49
      %s50 = sphi 0, %s47
      %s51 = sphi 0, %s50
      %s67 = sphi 0, %s51
      %s77 = sphi 0, %s79
      %s80 = sphi 0, %s77
      %s81 = sphi 0, %s80
      %s97 = sphi 0, %s81
      %s107 = sphi 0, %s109
      %s110 = sphi 0, %s107
      %s111 = sphi 0, %s110
      %s127 = sphi 0, %s111
      %s135 = sphi 0, %s137
      %s138 = sphi 0, %s135
      %s139 = sphi 0, %s138
      %s155 = sphi 0, %s139
    $region4: #{tpu_custom_call.1} parent=1 // loop_header_branch
      %21 = sbr.rel (%p19) target = $region8
    $region5: #{tpu_custom_call.1} parent=1 // loop_body
      %s23 = ssub.s32 %s18, 1
      %s24 = ssub.s32 %s18, 2
      %s34 = sadd.s32 1, %s27
      %p35 = scmp.ge.s32.totalorder %s34, 2
      %s36 = scalar_select %p35, 0, %s34
      %s37 = sadd.s32 1, %s26
      %s38 = scalar_select %p35, %s37, %s26
      %p39 = scmp.ge.s32.totalorder %s38, 2
      %s40 = scalar_select %p39, 0, %s38
      %s41 = sadd.s32 1, %s25
      %s42 = scalar_select %p39, %s41, %s25
      %p43 = scmp.ge.s32.totalorder %s42, 1
      %s44 = scalar_select %p43, 0, %s42
      %s45 = ssub.s32 %s26, %s40
      %p46 = scmp.eq.s32.totalorder %s45, 0
      %s48 = sadd.s32 %s47, 1
      %s49 = scalar_select %p46, %s47, %s48
      %p52 = pneg %p46
      %p53 = scmp.eq.s32.totalorder %s18, 3
      %p54 = por %p52, %p53
      %p55 = scmp.ne.s32.totalorder %s47, %s50
      %p56 = scmp.eq.s32.totalorder %s18, 0
      %p57 = por %p55, %p56
      %p58 = scmp.ne.s32.totalorder %s47, %s50
      %p59 = scmp.eq.s32.totalorder %s23, 3
      %p60 = por %p58, %p59
      %p61 = scmp.ne.s32.totalorder %s50, %s51
      %p62 = scmp.eq.s32.totalorder %s23, 0
      %p63 = por %p61, %p62
      %p64 = scmp.ne.s32.totalorder %s50, %s51
      %p65 = scmp.eq.s32.totalorder %s24, 3
      %p66 = por %p64, %p65
      %p68 = scmp.ne.s32.totalorder %s51, %s67
      %p69 = scmp.eq.s32.totalorder %s24, 0
      %p70 = por %p68, %p69
      %s71 = smul.u32 %s25, 2
      %s72 = sadd.s32 %s71, %s27
      %s73 = smul.u32 %s44, 2
      %s74 = sadd.s32 %s73, %s36
      %s75 = ssub.s32 %s72, %s74
      %p76 = scmp.eq.s32.totalorder %s75, 0
      %s78 = sadd.s32 %s77, 1
      %s79 = scalar_select %p76, %s77, %s78
      %p82 = pneg %p76
      %p83 = scmp.eq.s32.totalorder %s18, 3
      %p84 = por %p82, %p83
      %p85 = scmp.ne.s32.totalorder %s77, %s80
      %p86 = scmp.eq.s32.totalorder %s18, 0
      %p87 = por %p85, %p86
      %p88 = scmp.ne.s32.totalorder %s77, %s80
      %p89 = scmp.eq.s32.totalorder %s23, 3
      %p90 = por %p88, %p89
      %p91 = scmp.ne.s32.totalorder %s80, %s81
      %p92 = scmp.eq.s32.totalorder %s23, 0
      %p93 = por %p91, %p92
      %p94 = scmp.ne.s32.totalorder %s80, %s81
      %p95 = scmp.eq.s32.totalorder %s24, 3
      %p96 = por %p94, %p95
      %p98 = scmp.ne.s32.totalorder %s81, %s97
      %p99 = scmp.eq.s32.totalorder %s24, 0
      %p100 = por %p98, %p99
      %s101 = smul.u32 %s25, 2
      %s102 = sadd.s32 %s101, %s27
      %s103 = smul.u32 %s44, 2
      %s104 = sadd.s32 %s103, %s36
      %s105 = ssub.s32 %s102, %s104
      %p106 = scmp.eq.s32.totalorder %s105, 0
      %s108 = sadd.s32 %s107, 1
      %s109 = scalar_select %p106, %s107, %s108
      %p112 = pneg %p106
      %p113 = scmp.eq.s32.totalorder %s18, 3
      %p114 = por %p112, %p113
      %p115 = scmp.ne.s32.totalorder %s107, %s110
      %p116 = scmp.eq.s32.totalorder %s18, 0
      %p117 = por %p115, %p116
      %p118 = scmp.ne.s32.totalorder %s107, %s110
      %p119 = scmp.eq.s32.totalorder %s23, 3
      %p120 = por %p118, %p119
      %p121 = scmp.ne.s32.totalorder %s110, %s111
      %p122 = scmp.eq.s32.totalorder %s23, 0
      %p123 = por %p121, %p122
      %p124 = scmp.ne.s32.totalorder %s110, %s111
      %p125 = scmp.eq.s32.totalorder %s24, 3
      %p126 = por %p124, %p125
      %p128 = scmp.ne.s32.totalorder %s111, %s127
      %p129 = scmp.eq.s32.totalorder %s24, 0
      %p130 = por %p128, %p129
      %s131 = ssub.s32 %s25, %s44
      %s132 = ssub.s32 %s26, %s40
      %s133 = sor.u32 %s131, %s132
      %p134 = scmp.eq.s32.totalorder %s133, 0
      %s136 = sadd.s32 %s135, 1
      %s137 = scalar_select %p134, %s135, %s136
      %p140 = pneg %p134
      %p141 = scmp.eq.s32.totalorder %s18, 3
      %p142 = por %p140, %p141
      %p143 = scmp.ne.s32.totalorder %s135, %s138
      %p144 = scmp.eq.s32.totalorder %s18, 0
      %p145 = por %p143, %p144
      %p146 = scmp.ne.s32.totalorder %s135, %s138
      %p147 = scmp.eq.s32.totalorder %s23, 3
      %p148 = por %p146, %p147
      %p149 = scmp.ne.s32.totalorder %s138, %s139
      %p150 = scmp.eq.s32.totalorder %s23, 0
      %p151 = por %p149, %p150
      %p152 = scmp.ne.s32.totalorder %s138, %s139
      %p153 = scmp.eq.s32.totalorder %s24, 3
      %p154 = por %p152, %p153
      %p156 = scmp.ne.s32.totalorder %s139, %s155
      %p157 = scmp.eq.s32.totalorder %s24, 0
      %p158 = por %p156, %p157
      %p159 = scmp.le.s32.totalorder 1, %s18
      %p160 = scmp.lt.s32.totalorder %s18, 5
      %p161 = pnand %p159, %p160
      %p162 = pneg %p161
      // Predicated region
      $region9: #{tpu_custom_call.1} parent=5 // pred_check
        _
      $region10: #{tpu_custom_call.1} parent=5 // pred_check_branch
        %164 = sbr.rel (%p161) target = $region12
      $region11: #{tpu_custom_call.1} parent=5 // pred_region
        %s165 = ssub.s32 %s18, 1
      $region12: #{tpu_custom_call.1} parent=5 // pred_fallthru
        _
      %p166 = scmp.lt.s32.totalorder %s18, 4
      // Predicated region
      $region13: #{tpu_custom_call.1} parent=5 // pred_check
        %p167 = pneg %p166
      $region14: #{tpu_custom_call.1} parent=5 // pred_check_branch
        %169 = sbr.rel (%p167) target = $region16
      $region15: #{tpu_custom_call.1} parent=5 // pred_region
        // Predicated region
        $region17: #{tpu_custom_call.1} parent=15 // pred_check
          %p170 = pneg %p57
        $region18: #{tpu_custom_call.1} parent=15 // pred_check_branch
          %172 = sbr.rel (%p170) target = $region20
        $region19: #{tpu_custom_call.1} parent=15 // pred_region
          %s173 = sand.u32 %s47, 1
          %s174 = scalar_lea.sflag [#allocation4], %s173
          %s175 = sand.u32 %s47, 1
          %s176 = smul.addr %s175, 16
          %s177 = scalar_lea.vmem [#allocation3], %s176
          %s178 = smul.u32 2, %s26
          %s180 = ssub.s32 256, 256
          %181 = vsyncadd %s174, %s180
          %s182 = smul.addr %s178, 2
          %s183 = smul.addr %s182, 64
          %s184 = scalar_lea.hbm %s0, %s183
          %s185 = sshll.u32 %s177, 4
          %s186 = int_to_ptr.vmem [resolvable:$true] %s185
          %191 = dma.hbm_to_vmem [thread:$0]  %s184, 256, %s186, %s174, 128, 128, 8
        $region20: #{tpu_custom_call.1} parent=15 // pred_fallthru
          _
        // Predicated region
        $region21: #{tpu_custom_call.1} parent=15 // pred_check
          %p192 = pneg %p87
        $region22: #{tpu_custom_call.1} parent=15 // pred_check_branch
          %194 = sbr.rel (%p192) target = $region24
        $region23: #{tpu_custom_call.1} parent=15 // pred_region
          %s195 = sand.u32 %s18, 1
          %s196 = scalar_lea.sflag [#allocation7], %s195
          %s197 = sand.u32 %s77, 1
          %s198 = smul.addr %s197, 512
          %s199 = scalar_lea.vmem [#allocation6], %s198
          %s200 = smul.u32 %s25, 2
          %s201 = sadd.s32 %s200, %s27
          %s202 = smul.u32 4, %s201
          %s204 = ssub.s32 8192, 8192
          %205 = vsyncadd %s196, %s204
          %s206 = smul.addr %s202, 64
          %s207 = scalar_lea.hbm %s1, %s206
          %s208 = sshll.u32 %s199, 4
          %s209 = int_to_ptr.vmem [resolvable:$true] %s208
          %214 = dma.hbm_to_vmem [thread:$0]  %s207, 8192, %s209, %s196, 512, 256, 16
        $region24: #{tpu_custom_call.1} parent=15 // pred_fallthru
          _
        // Predicated region
        $region25: #{tpu_custom_call.1} parent=15 // pred_check
          %p215 = pneg %p117
        $region26: #{tpu_custom_call.1} parent=15 // pred_check_branch
          %217 = sbr.rel (%p215) target = $region28
        $region27: #{tpu_custom_call.1} parent=15 // pred_region
          %s218 = sand.u32 %s18, 1
          %s219 = scalar_lea.sflag [#allocation7], %s218
          %s220 = sand.u32 %s107, 1
          %s221 = smul.addr %s220, 256
          %s222 = scalar_lea.vmem [#allocation8], %s221
          %s223 = smul.u32 %s25, 2
          %s224 = sadd.s32 %s223, %s27
          %s225 = smul.u32 32, %s224
          %s227 = ssub.s32 4096, 4096
          %228 = vsyncadd %s219, %s227
          %s229 = smul.addr %s225, 2
          %s230 = smul.addr %s229, 64
          %s231 = scalar_lea.hbm %s2, %s230
          %s232 = sshll.u32 %s222, 4
          %s233 = int_to_ptr.vmem [resolvable:$true] %s232
          %238 = dma.hbm_to_vmem [thread:$0]  %s231, 4096, %s233, %s219, 128, 128, 8
        $region28: #{tpu_custom_call.1} parent=15 // pred_fallthru
          _
      $region16: #{tpu_custom_call.1} parent=5 // pred_fallthru
        _
      %p239 = scmp.le.s32.totalorder 1, %s18
      %p240 = scmp.lt.s32.totalorder %s18, 5
      %p241 = pnand %p239, %p240
      %p242 = pneg %p241
      // Predicated region
      $region29: #{tpu_custom_call.1} parent=5 // pred_check
        _
      $region30: #{tpu_custom_call.1} parent=5 // pred_check_branch
        %244 = sbr.rel (%p241) target = $region32
      $region31: #{tpu_custom_call.1} parent=5 // pred_region
        %s245 = ssub.s32 %s18, 1
        %s246 = sand.u32 %s50, 1
        %s247 = scalar_lea.sflag [#allocation4], %s246
        %s248 = sand.u32 %s50, 1
        %s249 = smul.addr %s248, 16
        %s250 = scalar_lea.vmem [#allocation3], %s249
        // Predicated region
        $region33: #{tpu_custom_call.1} parent=31 // pred_check
          %p251 = pneg %p63
        $region34: #{tpu_custom_call.1} parent=31 // pred_check_branch
          %253 = sbr.rel (%p251) target = $region36
        $region35: #{tpu_custom_call.1} parent=31 // pred_region
          %254 = dma.done %s247, 256
        $region36: #{tpu_custom_call.1} parent=31 // pred_fallthru
          _
        %s255 = sand.u32 %s23, 1
        %s256 = scalar_lea.sflag [#allocation7], %s255
        %s257 = sand.u32 %s80, 1
        %s258 = smul.addr %s257, 512
        %s259 = scalar_lea.vmem [#allocation6], %s258
        // Predicated region
        $region37: #{tpu_custom_call.1} parent=31 // pred_check
          %p260 = pneg %p93
        $region38: #{tpu_custom_call.1} parent=31 // pred_check_branch
          %262 = sbr.rel (%p260) target = $region40
        $region39: #{tpu_custom_call.1} parent=31 // pred_region
          %263 = dma.done %s256, 8192
        $region40: #{tpu_custom_call.1} parent=31 // pred_fallthru
          _
        %s264 = sand.u32 %s23, 1
        %s265 = scalar_lea.sflag [#allocation7], %s264
        %s266 = sand.u32 %s110, 1
        %s267 = smul.addr %s266, 256
        %s268 = scalar_lea.vmem [#allocation8], %s267
        // Predicated region
        $region41: #{tpu_custom_call.1} parent=31 // pred_check
          %p269 = pneg %p123
        $region42: #{tpu_custom_call.1} parent=31 // pred_check_branch
          %271 = sbr.rel (%p269) target = $region44
        $region43: #{tpu_custom_call.1} parent=31 // pred_region
          %272 = dma.done %s265, 4096
        $region44: #{tpu_custom_call.1} parent=31 // pred_fallthru
          _
        %s273 = sand.u32 %s50, 1
        %s274 = scalar_lea.sflag [#allocation4], %s273
        %s275 = sand.u32 %s50, 1
        %s276 = smul.addr %s275, 16
        %s277 = scalar_lea.vmem [#allocation3], %s276
        %p278 = pneg %p63
        %p279 = pneg %p60
        %s280 = sand.u32 %s23, 1
        %s281 = scalar_lea.sflag [#allocation7], %s280
        %s282 = sand.u32 %s80, 1
        %s283 = smul.addr %s282, 512
        %s284 = scalar_lea.vmem [#allocation6], %s283
        %p285 = pneg %p93
        %p286 = pneg %p90
        %s287 = sand.u32 %s23, 1
        %s288 = scalar_lea.sflag [#allocation7], %s287
        %s289 = sand.u32 %s110, 1
        %s290 = smul.addr %s289, 256
        %s291 = scalar_lea.vmem [#allocation8], %s290
        %p292 = pneg %p123
        %p293 = pneg %p120
        %p294 = pneg %p151
        %p295 = pneg %p148
        %s296 = sand.u32 %s138, 1
        %s297 = scalar_lea.sflag [#allocation5], %s296
        %s298 = sand.u32 %s138, 1
        %s299 = smul.addr %s298, 16
        %s300 = scalar_lea.vmem [#allocation9], %s299
        %s301 = smul.u32 2, %s29
        %s302 = smul.u32 %s28, 2
        %s303 = sadd.s32 %s302, %s30
        %s304 = smul.u32 4, %s303
        %s305 = smul.u32 %s28, 2
        %s306 = sadd.s32 %s305, %s30
        %s307 = smul.u32 32, %s306
        %s308 = smul.u32 2, %s29
        %p309 = scmp.eq.s32.totalorder %s30, 0
        // Predicated region
        $region45: #{tpu_custom_call.1} parent=31 // pred_check
          %p310 = pneg %p309
        $region46: #{tpu_custom_call.1} parent=31 // pred_check_branch
          %312 = sbr.rel (%p310) target = $region48
        $region47: #{tpu_custom_call.1} parent=31 // pred_region
          %313 = vst [vmem:[#allocation2] sm:$0xff] 0.0
          %314 = vst [vmem:[#allocation2 + $0x8] sm:$0xff] 0.0
          %315 = vst [vmem:[#allocation2 + $0x10] sm:$0xff] 0.0
          %316 = vst [vmem:[#allocation2 + $0x18] sm:$0xff] 0.0
        $region48: #{tpu_custom_call.1} parent=31 // pred_fallthru
          _
        %v317 = vld [vmem:[%s250] sm:$0xff]
        %v318 = vld [vmem:[%s250 + $0x8] sm:$0xff]
        %v319 = vld [vmem:[%s259] sm:$0xff]
        %v320 = vld [vmem:[%s259 + $0x8] sm:$0xff]
        %v321 = vld [vmem:[%s259 + $0x10] sm:$0xff]
        %v322 = vld [vmem:[%s259 + $0x18] sm:$0xff]
        %v323 = vld [vmem:[%s259 + $0x20] sm:$0xff]
        %v324 = vld [vmem:[%s259 + $0x28] sm:$0xff]
        %v325 = vld [vmem:[%s259 + $0x30] sm:$0xff]
        %v326 = vld [vmem:[%s259 + $0x38] sm:$0xff]
        %v327 = vld [vmem:[%s259 + $0x40] sm:$0xff]
        %v328 = vld [vmem:[%s259 + $0x48] sm:$0xff]
        %v329 = vld [vmem:[%s259 + $0x50] sm:$0xff]
        %v330 = vld [vmem:[%s259 + $0x58] sm:$0xff]
        %v331 = vld [vmem:[%s259 + $0x60] sm:$0xff]
        %v332 = vld [vmem:[%s259 + $0x68] sm:$0xff]
        %v333 = vld [vmem:[%s259 + $0x70] sm:$0xff]
        %v334 = vld [vmem:[%s259 + $0x78] sm:$0xff]
        %v335 = vld [vmem:[%s259 + $0x80] sm:$0xff]
        %v336 = vld [vmem:[%s259 + $0x88] sm:$0xff]
        %v337 = vld [vmem:[%s259 + $0x90] sm:$0xff]
        %v338 = vld [vmem:[%s259 + $0x98] sm:$0xff]
        %v339 = vld [vmem:[%s259 + $0xa0] sm:$0xff]
        %v340 = vld [vmem:[%s259 + $0xa8] sm:$0xff]
        %v341 = vld [vmem:[%s259 + $0xb0] sm:$0xff]
        %v342 = vld [vmem:[%s259 + $0xb8] sm:$0xff]
        %v343 = vld [vmem:[%s259 + $0xc0] sm:$0xff]
        %v344 = vld [vmem:[%s259 + $0xc8] sm:$0xff]
        %v345 = vld [vmem:[%s259 + $0xd0] sm:$0xff]
        %v346 = vld [vmem:[%s259 + $0xd8] sm:$0xff]
        %v347 = vld [vmem:[%s259 + $0xe0] sm:$0xff]
        %v348 = vld [vmem:[%s259 + $0xe8] sm:$0xff]
        %v349 = vld [vmem:[%s259 + $0xf0] sm:$0xff]
        %v350 = vld [vmem:[%s259 + $0xf8] sm:$0xff]
        %v351 = vld [vmem:[%s259 + $0x100] sm:$0xff]
        %v352 = vld [vmem:[%s259 + $0x108] sm:$0xff]
        %v353 = vld [vmem:[%s259 + $0x110] sm:$0xff]
        %v354 = vld [vmem:[%s259 + $0x118] sm:$0xff]
        %v355 = vld [vmem:[%s259 + $0x120] sm:$0xff]
        %v356 = vld [vmem:[%s259 + $0x128] sm:$0xff]
        %v357 = vld [vmem:[%s259 + $0x130] sm:$0xff]
        %v358 = vld [vmem:[%s259 + $0x138] sm:$0xff]
        %v359 = vld [vmem:[%s259 + $0x140] sm:$0xff]
        %v360 = vld [vmem:[%s259 + $0x148] sm:$0xff]
        %v361 = vld [vmem:[%s259 + $0x150] sm:$0xff]
        %v362 = vld [vmem:[%s259 + $0x158] sm:$0xff]
        %v363 = vld [vmem:[%s259 + $0x160] sm:$0xff]
        %v364 = vld [vmem:[%s259 + $0x168] sm:$0xff]
        %v365 = vld [vmem:[%s259 + $0x170] sm:$0xff]
        %v366 = vld [vmem:[%s259 + $0x178] sm:$0xff]
        %v367 = vld [vmem:[%s259 + $0x180] sm:$0xff]
        %v368 = vld [vmem:[%s259 + $0x188] sm:$0xff]
        %v369 = vld [vmem:[%s259 + $0x190] sm:$0xff]
        %v370 = vld [vmem:[%s259 + $0x198] sm:$0xff]
        %v371 = vld [vmem:[%s259 + $0x1a0] sm:$0xff]
        %v372 = vld [vmem:[%s259 + $0x1a8] sm:$0xff]
        %v373 = vld [vmem:[%s259 + $0x1b0] sm:$0xff]
        %v374 = vld [vmem:[%s259 + $0x1b8] sm:$0xff]
        %v375 = vld [vmem:[%s259 + $0x1c0] sm:$0xff]
        %v376 = vld [vmem:[%s259 + $0x1c8] sm:$0xff]
        %v377 = vld [vmem:[%s259 + $0x1d0] sm:$0xff]
        %v378 = vld [vmem:[%s259 + $0x1d8] sm:$0xff]
        %v379 = vld [vmem:[%s259 + $0x1e0] sm:$0xff]
        %v380 = vld [vmem:[%s259 + $0x1e8] sm:$0xff]
        %v381 = vld [vmem:[%s259 + $0x1f0] sm:$0xff]
        %v382 = vld [vmem:[%s259 + $0x1f8] sm:$0xff]
        %v385 = vunpack.c.l.b16 %v317
        %v386 = vunpack.c.h.b16 %v317
        %v387 = vunpack.c.l.b16 %v318
        %v388 = vunpack.c.h.b16 %v318
        %v389 = vpack.c.b16 %v387, %v385
        %v390 = vpack.c.b16 %v388, %v386
        %v457 = vunpack.c.l.b16 %v319
        %v458 = vunpack.c.h.b16 %v319
        %v459 = vunpack.c.l.b16 %v320
        %v460 = vunpack.c.h.b16 %v320
        %v461 = vunpack.c.l.b16 %v321
        %v462 = vunpack.c.h.b16 %v321
        %v463 = vunpack.c.l.b16 %v322
        %v464 = vunpack.c.h.b16 %v322
        %v465 = vunpack.c.l.b16 %v323
        %v466 = vunpack.c.h.b16 %v323
        %v467 = vunpack.c.l.b16 %v324
        %v468 = vunpack.c.h.b16 %v324
        %v469 = vunpack.c.l.b16 %v325
        %v470 = vunpack.c.h.b16 %v325
        %v471 = vunpack.c.l.b16 %v326
        %v472 = vunpack.c.h.b16 %v326
        %v473 = vunpack.c.l.b16 %v327
        %v474 = vunpack.c.h.b16 %v327
        %v475 = vunpack.c.l.b16 %v328
        %v476 = vunpack.c.h.b16 %v328
        %v477 = vunpack.c.l.b16 %v329
        %v478 = vunpack.c.h.b16 %v329
        %v479 = vunpack.c.l.b16 %v330
        %v480 = vunpack.c.h.b16 %v330
        %v481 = vunpack.c.l.b16 %v331
        %v482 = vunpack.c.h.b16 %v331
        %v483 = vunpack.c.l.b16 %v332
        %v484 = vunpack.c.h.b16 %v332
        %v485 = vunpack.c.l.b16 %v333
        %v486 = vunpack.c.h.b16 %v333
        %v487 = vunpack.c.l.b16 %v334
        %v488 = vunpack.c.h.b16 %v334
        %v489 = vunpack.c.l.b16 %v335
        %v490 = vunpack.c.h.b16 %v335
        %v491 = vunpack.c.l.b16 %v336
        %v492 = vunpack.c.h.b16 %v336
        %v493 = vunpack.c.l.b16 %v337
        %v494 = vunpack.c.h.b16 %v337
        %v495 = vunpack.c.l.b16 %v338
        %v496 = vunpack.c.h.b16 %v338
        %v497 = vunpack.c.l.b16 %v339
        %v498 = vunpack.c.h.b16 %v339
        %v499 = vunpack.c.l.b16 %v340
        %v500 = vunpack.c.h.b16 %v340
        %v501 = vunpack.c.l.b16 %v341
        %v502 = vunpack.c.h.b16 %v341
        %v503 = vunpack.c.l.b16 %v342
        %v504 = vunpack.c.h.b16 %v342
        %v505 = vunpack.c.l.b16 %v343
        %v506 = vunpack.c.h.b16 %v343
        %v507 = vunpack.c.l.b16 %v344
        %v508 = vunpack.c.h.b16 %v344
        %v509 = vunpack.c.l.b16 %v345
        %v510 = vunpack.c.h.b16 %v345
        %v511 = vunpack.c.l.b16 %v346
        %v512 = vunpack.c.h.b16 %v346
        %v513 = vunpack.c.l.b16 %v347
        %v514 = vunpack.c.h.b16 %v347
        %v515 = vunpack.c.l.b16 %v348
        %v516 = vunpack.c.h.b16 %v348
        %v517 = vunpack.c.l.b16 %v349
        %v518 = vunpack.c.h.b16 %v349
        %v519 = vunpack.c.l.b16 %v350
        %v520 = vunpack.c.h.b16 %v350
        %v521 = vunpack.c.l.b16 %v351
        %v522 = vunpack.c.h.b16 %v351
        %v523 = vunpack.c.l.b16 %v352
        %v524 = vunpack.c.h.b16 %v352
        %v525 = vunpack.c.l.b16 %v353
        %v526 = vunpack.c.h.b16 %v353
        %v527 = vunpack.c.l.b16 %v354
        %v528 = vunpack.c.h.b16 %v354
        %v529 = vunpack.c.l.b16 %v355
        %v530 = vunpack.c.h.b16 %v355
        %v531 = vunpack.c.l.b16 %v356
        %v532 = vunpack.c.h.b16 %v356
        %v533 = vunpack.c.l.b16 %v357
        %v534 = vunpack.c.h.b16 %v357
        %v535 = vunpack.c.l.b16 %v358
        %v536 = vunpack.c.h.b16 %v358
        %v537 = vunpack.c.l.b16 %v359
        %v538 = vunpack.c.h.b16 %v359
        %v539 = vunpack.c.l.b16 %v360
        %v540 = vunpack.c.h.b16 %v360
        %v541 = vunpack.c.l.b16 %v361
        %v542 = vunpack.c.h.b16 %v361
        %v543 = vunpack.c.l.b16 %v362
        %v544 = vunpack.c.h.b16 %v362
        %v545 = vunpack.c.l.b16 %v363
        %v546 = vunpack.c.h.b16 %v363
        %v547 = vunpack.c.l.b16 %v364
        %v548 = vunpack.c.h.b16 %v364
        %v549 = vunpack.c.l.b16 %v365
        %v550 = vunpack.c.h.b16 %v365
        %v551 = vunpack.c.l.b16 %v366
        %v552 = vunpack.c.h.b16 %v366
        %v553 = vunpack.c.l.b16 %v367
        %v554 = vunpack.c.h.b16 %v367
        %v555 = vunpack.c.l.b16 %v368
        %v556 = vunpack.c.h.b16 %v368
        %v557 = vunpack.c.l.b16 %v369
        %v558 = vunpack.c.h.b16 %v369
        %v559 = vunpack.c.l.b16 %v370
        %v560 = vunpack.c.h.b16 %v370
        %v561 = vunpack.c.l.b16 %v371
        %v562 = vunpack.c.h.b16 %v371
        %v563 = vunpack.c.l.b16 %v372
        %v564 = vunpack.c.h.b16 %v372
        %v565 = vunpack.c.l.b16 %v373
        %v566 = vunpack.c.h.b16 %v373
        %v567 = vunpack.c.l.b16 %v374
        %v568 = vunpack.c.h.b16 %v374
        %v569 = vunpack.c.l.b16 %v375
        %v570 = vunpack.c.h.b16 %v375
        %v571 = vunpack.c.l.b16 %v376
        %v572 = vunpack.c.h.b16 %v376
        %v573 = vunpack.c.l.b16 %v377
        %v574 = vunpack.c.h.b16 %v377
        %v575 = vunpack.c.l.b16 %v378
        %v576 = vunpack.c.h.b16 %v378
        %v577 = vunpack.c.l.b16 %v379
        %v578 = vunpack.c.h.b16 %v379
        %v579 = vunpack.c.l.b16 %v380
        %v580 = vunpack.c.h.b16 %v380
        %v581 = vunpack.c.l.b16 %v381
        %v582 = vunpack.c.h.b16 %v381
        %v583 = vunpack.c.l.b16 %v382
        %v584 = vunpack.c.h.b16 %v382
        %v585 = vpack.c.b16 %v461, %v457
        %v586 = vpack.c.b16 %v462, %v458
        %v587 = vpack.c.b16 %v463, %v459
        %v588 = vpack.c.b16 %v464, %v460
        %v589 = vpack.c.b16 %v469, %v465
        %v590 = vpack.c.b16 %v470, %v466
        %v591 = vpack.c.b16 %v471, %v467
        %v592 = vpack.c.b16 %v472, %v468
        %v593 = vpack.c.b16 %v477, %v473
        %v594 = vpack.c.b16 %v478, %v474
        %v595 = vpack.c.b16 %v479, %v475
        %v596 = vpack.c.b16 %v480, %v476
        %v597 = vpack.c.b16 %v485, %v481
        %v598 = vpack.c.b16 %v486, %v482
        %v599 = vpack.c.b16 %v487, %v483
        %v600 = vpack.c.b16 %v488, %v484
        %v601 = vpack.c.b16 %v493, %v489
        %v602 = vpack.c.b16 %v494, %v490
        %v603 = vpack.c.b16 %v495, %v491
        %v604 = vpack.c.b16 %v496, %v492
        %v605 = vpack.c.b16 %v501, %v497
        %v606 = vpack.c.b16 %v502, %v498
        %v607 = vpack.c.b16 %v503, %v499
        %v608 = vpack.c.b16 %v504, %v500
        %v609 = vpack.c.b16 %v509, %v505
        %v610 = vpack.c.b16 %v510, %v506
        %v611 = vpack.c.b16 %v511, %v507
        %v612 = vpack.c.b16 %v512, %v508
        %v613 = vpack.c.b16 %v517, %v513
        %v614 = vpack.c.b16 %v518, %v514
        %v615 = vpack.c.b16 %v519, %v515
        %v616 = vpack.c.b16 %v520, %v516
        %v617 = vpack.c.b16 %v525, %v521
        %v618 = vpack.c.b16 %v526, %v522
        %v619 = vpack.c.b16 %v527, %v523
        %v620 = vpack.c.b16 %v528, %v524
        %v621 = vpack.c.b16 %v533, %v529
        %v622 = vpack.c.b16 %v534, %v530
        %v623 = vpack.c.b16 %v535, %v531
        %v624 = vpack.c.b16 %v536, %v532
        %v625 = vpack.c.b16 %v541, %v537
        %v626 = vpack.c.b16 %v542, %v538
        %v627 = vpack.c.b16 %v543, %v539
        %v628 = vpack.c.b16 %v544, %v540
        %v629 = vpack.c.b16 %v549, %v545
        %v630 = vpack.c.b16 %v550, %v546
        %v631 = vpack.c.b16 %v551, %v547
        %v632 = vpack.c.b16 %v552, %v548
        %v633 = vpack.c.b16 %v557, %v553
        %v634 = vpack.c.b16 %v558, %v554
        %v635 = vpack.c.b16 %v559, %v555
        %v636 = vpack.c.b16 %v560, %v556
        %v637 = vpack.c.b16 %v565, %v561
        %v638 = vpack.c.b16 %v566, %v562
        %v639 = vpack.c.b16 %v567, %v563
        %v640 = vpack.c.b16 %v568, %v564
        %v641 = vpack.c.b16 %v573, %v569
        %v642 = vpack.c.b16 %v574, %v570
        %v643 = vpack.c.b16 %v575, %v571
        %v644 = vpack.c.b16 %v576, %v572
        %v645 = vpack.c.b16 %v581, %v577
        %v646 = vpack.c.b16 %v582, %v578
        %v647 = vpack.c.b16 %v583, %v579
        %v648 = vpack.c.b16 %v584, %v580
        %713 = vmatprep.subr.bf16.mxu0 %v586
        %714 = vmatpush1.bf16.msra.mxu0 %v585
        %715 = vmatprep.subr.bf16.mxu0 %v590
        %716 = vmatpush1.bf16.msra.mxu0 %v589
        %717 = vmatprep.subr.bf16.mxu0 %v594
        %718 = vmatpush1.bf16.msra.mxu0 %v593
        %719 = vmatprep.subr.bf16.mxu0 %v598
        %720 = vmatpush1.bf16.msra.mxu0 %v597
        %721 = vmatprep.subr.bf16.mxu0 %v602
        %722 = vmatpush1.bf16.msra.mxu0 %v601
        %723 = vmatprep.subr.bf16.mxu0 %v606
        %724 = vmatpush1.bf16.msra.mxu0 %v605
        %725 = vmatprep.subr.bf16.mxu0 %v610
        %726 = vmatpush1.bf16.msra.mxu0 %v609
        %727 = vmatprep.subr.bf16.mxu0 %v614
        %728 = vmatpush1.bf16.msra.mxu0 %v613
        %729 = vmatprep.subr.bf16.mxu0 %v618
        %730 = vmatpush1.bf16.msra.mxu0 %v617
        %731 = vmatprep.subr.bf16.mxu0 %v622
        %732 = vmatpush1.bf16.msra.mxu0 %v621
        %733 = vmatprep.subr.bf16.mxu0 %v626
        %734 = vmatpush1.bf16.msra.mxu0 %v625
        %735 = vmatprep.subr.bf16.mxu0 %v630
        %736 = vmatpush1.bf16.msra.mxu0 %v629
        %737 = vmatprep.subr.bf16.mxu0 %v634
        %738 = vmatpush1.bf16.msra.mxu0 %v633
        %739 = vmatprep.subr.bf16.mxu0 %v638
        %740 = vmatpush1.bf16.msra.mxu0 %v637
        %741 = vmatprep.subr.bf16.mxu0 %v642
        %742 = vmatpush1.bf16.msra.mxu0 %v641
        %743 = vmatprep.subr.bf16.mxu0 %v646
        %744 = vmatpush1.bf16.msra.mxu0 %v645
        %745 = vmatprep.mubr.bf16.mxu0 %v390
        %746 = vmatmul.mubr.bf16.gmra.mrb[0].mxu0 %v389
        %v747 = vpop.f32.mrb[0].mxu0
        %v748 = vadd.f32 0.0, %v747
        %v749 = vpop.f32.mrb[0].mxu0
        %v750 = vadd.f32 0.0, %v749
        %v751 = vpop.f32.mrb[0].mxu0
        %v752 = vadd.f32 0.0, %v751
        %v753 = vpop.f32.mrb[0].mxu0
        %v754 = vadd.f32 0.0, %v753
        %755 = vdwg.mxu0
        %756 = vmatprep.subr.bf16.mxu0 %v588
        %757 = vmatpush1.bf16.msra.mxu0 %v587
        %758 = vmatprep.subr.bf16.mxu0 %v592
        %759 = vmatpush1.bf16.msra.mxu0 %v591
        %760 = vmatprep.subr.bf16.mxu0 %v596
        %761 = vmatpush1.bf16.msra.mxu0 %v595
        %762 = vmatprep.subr.bf16.mxu0 %v600
        %763 = vmatpush1.bf16.msra.mxu0 %v599
        %764 = vmatprep.subr.bf16.mxu0 %v604
        %765 = vmatpush1.bf16.msra.mxu0 %v603
        %766 = vmatprep.subr.bf16.mxu0 %v608
        %767 = vmatpush1.bf16.msra.mxu0 %v607
        %768 = vmatprep.subr.bf16.mxu0 %v612
        %769 = vmatpush1.bf16.msra.mxu0 %v611
        %770 = vmatprep.subr.bf16.mxu0 %v616
        %771 = vmatpush1.bf16.msra.mxu0 %v615
        %772 = vmatprep.subr.bf16.mxu0 %v620
        %773 = vmatpush1.bf16.msra.mxu0 %v619
        %774 = vmatprep.subr.bf16.mxu0 %v624
        %775 = vmatpush1.bf16.msra.mxu0 %v623
        %776 = vmatprep.subr.bf16.mxu0 %v628
        %777 = vmatpush1.bf16.msra.mxu0 %v627
        %778 = vmatprep.subr.bf16.mxu0 %v632
        %779 = vmatpush1.bf16.msra.mxu0 %v631
        %780 = vmatprep.subr.bf16.mxu0 %v636
        %781 = vmatpush1.bf16.msra.mxu0 %v635
        %782 = vmatprep.subr.bf16.mxu0 %v640
        %783 = vmatpush1.bf16.msra.mxu0 %v639
        %784 = vmatprep.subr.bf16.mxu0 %v644
        %785 = vmatpush1.bf16.msra.mxu0 %v643
        %786 = vmatprep.subr.bf16.mxu0 %v648
        %787 = vmatpush1.bf16.msra.mxu0 %v647
        %788 = vmatprep.mubr.bf16.mxu0 %v390
        %789 = vmatmul.mubr.bf16.gmra.mrb[0].mxu0 %v389
        %v790 = vpop.f32.mrb[0].mxu0
        %v791 = vadd.f32 0.0, %v790
        %v792 = vpop.f32.mrb[0].mxu0
        %v793 = vadd.f32 0.0, %v792
        %v794 = vpop.f32.mrb[0].mxu0
        %v795 = vadd.f32 0.0, %v794
        %v796 = vpop.f32.mrb[0].mxu0
        %v797 = vadd.f32 0.0, %v796
        %798 = vdwg.mxu0
        %v799 = vxor.u32 %v748, 2147483648
        %v800 = vxor.u32 %v750, 2147483648
        %v801 = vxor.u32 %v752, 2147483648
        %v802 = vxor.u32 %v754, 2147483648
        %v803 = vmul.f32 %v799, 1.442695
        %v804 = vpow.pop %v803
        %v805 = vmul.f32 %v800, 1.442695
        %v806 = vpow.pop %v805
        %v807 = vmul.f32 %v801, 1.442695
        %v808 = vpow.pop %v807
        %v809 = vmul.f32 %v802, 1.442695
        %v810 = vpow.pop %v809
        %v811 = vadd.f32 %v804, 1.0
        %v812 = vadd.f32 %v806, 1.0
        %v813 = vadd.f32 %v808, 1.0
        %v814 = vadd.f32 %v810, 1.0
        %v815 = vrcp.pop %v811
        %v816 = vmul.f32 1.0, %v815
        %v817 = vrcp.pop %v812
        %v818 = vmul.f32 1.0, %v817
        %v819 = vrcp.pop %v813
        %v820 = vmul.f32 1.0, %v819
        %v821 = vrcp.pop %v814
        %v822 = vmul.f32 1.0, %v821
        %v823 = vmul.f32 %v748, %v816
        %v824 = vmul.f32 %v750, %v818
        %v825 = vmul.f32 %v752, %v820
        %v826 = vmul.f32 %v754, %v822
        %v827 = vmul.f32 %v823, %v791
        %v828 = vmul.f32 %v824, %v793
        %v829 = vmul.f32 %v825, %v795
        %v830 = vmul.f32 %v826, %v797
        %v831 = vld [vmem:[#allocation2] sm:$0xff]
        %v832 = vld [vmem:[#allocation2 + $0x8] sm:$0xff]
        %v833 = vld [vmem:[#allocation2 + $0x10] sm:$0xff]
        %v834 = vld [vmem:[#allocation2 + $0x18] sm:$0xff]
        %v835 = vpack.c.bf16 %v829, %v827
        %v836 = vpack.c.bf16 %v830, %v828
        %v837 = vld [vmem:[%s268] sm:$0xff]
        %v838 = vld [vmem:[%s268 + $0x8] sm:$0xff]
        %v839 = vld [vmem:[%s268 + $0x10] sm:$0xff]
        %v840 = vld [vmem:[%s268 + $0x18] sm:$0xff]
        %v841 = vld [vmem:[%s268 + $0x20] sm:$0xff]
        %v842 = vld [vmem:[%s268 + $0x28] sm:$0xff]
        %v843 = vld [vmem:[%s268 + $0x30] sm:$0xff]
        %v844 = vld [vmem:[%s268 + $0x38] sm:$0xff]
        %v845 = vld [vmem:[%s268 + $0x40] sm:$0xff]
        %v846 = vld [vmem:[%s268 + $0x48] sm:$0xff]
        %v847 = vld [vmem:[%s268 + $0x50] sm:$0xff]
        %v848 = vld [vmem:[%s268 + $0x58] sm:$0xff]
        %v849 = vld [vmem:[%s268 + $0x60] sm:$0xff]
        %v850 = vld [vmem:[%s268 + $0x68] sm:$0xff]
        %v851 = vld [vmem:[%s268 + $0x70] sm:$0xff]
        %v852 = vld [vmem:[%s268 + $0x78] sm:$0xff]
        %v853 = vld [vmem:[%s268 + $0x80] sm:$0xff]
        %v854 = vld [vmem:[%s268 + $0x88] sm:$0xff]
        %v855 = vld [vmem:[%s268 + $0x90] sm:$0xff]
        %v856 = vld [vmem:[%s268 + $0x98] sm:$0xff]
        %v857 = vld [vmem:[%s268 + $0xa0] sm:$0xff]
        %v858 = vld [vmem:[%s268 + $0xa8] sm:$0xff]
        %v859 = vld [vmem:[%s268 + $0xb0] sm:$0xff]
        %v860 = vld [vmem:[%s268 + $0xb8] sm:$0xff]
        %v861 = vld [vmem:[%s268 + $0xc0] sm:$0xff]
        %v862 = vld [vmem:[%s268 + $0xc8] sm:$0xff]
        %v863 = vld [vmem:[%s268 + $0xd0] sm:$0xff]
        %v864 = vld [vmem:[%s268 + $0xd8] sm:$0xff]
        %v865 = vld [vmem:[%s268 + $0xe0] sm:$0xff]
        %v866 = vld [vmem:[%s268 + $0xe8] sm:$0xff]
        %v867 = vld [vmem:[%s268 + $0xf0] sm:$0xff]
        %v868 = vld [vmem:[%s268 + $0xf8] sm:$0xff]
        %v901 = vunpack.c.l.b16 %v837
        %v902 = vunpack.c.h.b16 %v837
        %v903 = vunpack.c.l.b16 %v838
        %v904 = vunpack.c.h.b16 %v838
        %v905 = vunpack.c.l.b16 %v839
        %v906 = vunpack.c.h.b16 %v839
        %v907 = vunpack.c.l.b16 %v840
        %v908 = vunpack.c.h.b16 %v840
        %v909 = vunpack.c.l.b16 %v841
        %v910 = vunpack.c.h.b16 %v841
        %v911 = vunpack.c.l.b16 %v842
        %v912 = vunpack.c.h.b16 %v842
        %v913 = vunpack.c.l.b16 %v843
        %v914 = vunpack.c.h.b16 %v843
        %v915 = vunpack.c.l.b16 %v844
        %v916 = vunpack.c.h.b16 %v844
        %v917 = vunpack.c.l.b16 %v845
        %v918 = vunpack.c.h.b16 %v845
        %v919 = vunpack.c.l.b16 %v846
        %v920 = vunpack.c.h.b16 %v846
        %v921 = vunpack.c.l.b16 %v847
        %v922 = vunpack.c.h.b16 %v847
        %v923 = vunpack.c.l.b16 %v848
        %v924 = vunpack.c.h.b16 %v848
        %v925 = vunpack.c.l.b16 %v849
        %v926 = vunpack.c.h.b16 %v849
        %v927 = vunpack.c.l.b16 %v850
        %v928 = vunpack.c.h.b16 %v850
        %v929 = vunpack.c.l.b16 %v851
        %v930 = vunpack.c.h.b16 %v851
        %v931 = vunpack.c.l.b16 %v852
        %v932 = vunpack.c.h.b16 %v852
        %v933 = vunpack.c.l.b16 %v853
        %v934 = vunpack.c.h.b16 %v853
        %v935 = vunpack.c.l.b16 %v854
        %v936 = vunpack.c.h.b16 %v854
        %v937 = vunpack.c.l.b16 %v855
        %v938 = vunpack.c.h.b16 %v855
        %v939 = vunpack.c.l.b16 %v856
        %v940 = vunpack.c.h.b16 %v856
        %v941 = vunpack.c.l.b16 %v857
        %v942 = vunpack.c.h.b16 %v857
        %v943 = vunpack.c.l.b16 %v858
        %v944 = vunpack.c.h.b16 %v858
        %v945 = vunpack.c.l.b16 %v859
        %v946 = vunpack.c.h.b16 %v859
        %v947 = vunpack.c.l.b16 %v860
        %v948 = vunpack.c.h.b16 %v860
        %v949 = vunpack.c.l.b16 %v861
        %v950 = vunpack.c.h.b16 %v861
        %v951 = vunpack.c.l.b16 %v862
        %v952 = vunpack.c.h.b16 %v862
        %v953 = vunpack.c.l.b16 %v863
        %v954 = vunpack.c.h.b16 %v863
        %v955 = vunpack.c.l.b16 %v864
        %v956 = vunpack.c.h.b16 %v864
        %v957 = vunpack.c.l.b16 %v865
        %v958 = vunpack.c.h.b16 %v865
        %v959 = vunpack.c.l.b16 %v866
        %v960 = vunpack.c.h.b16 %v866
        %v961 = vunpack.c.l.b16 %v867
        %v962 = vunpack.c.h.b16 %v867
        %v963 = vunpack.c.l.b16 %v868
        %v964 = vunpack.c.h.b16 %v868
        %v965 = vpack.c.b16 %v903, %v901
        %v966 = vpack.c.b16 %v904, %v902
        %v967 = vpack.c.b16 %v907, %v905
        %v968 = vpack.c.b16 %v908, %v906
        %v969 = vpack.c.b16 %v911, %v909
        %v970 = vpack.c.b16 %v912, %v910
        %v971 = vpack.c.b16 %v915, %v913
        %v972 = vpack.c.b16 %v916, %v914
        %v973 = vpack.c.b16 %v919, %v917
        %v974 = vpack.c.b16 %v920, %v918
        %v975 = vpack.c.b16 %v923, %v921
        %v976 = vpack.c.b16 %v924, %v922
        %v977 = vpack.c.b16 %v927, %v925
        %v978 = vpack.c.b16 %v928, %v926
        %v979 = vpack.c.b16 %v931, %v929
        %v980 = vpack.c.b16 %v932, %v930
        %v981 = vpack.c.b16 %v935, %v933
        %v982 = vpack.c.b16 %v936, %v934
        %v983 = vpack.c.b16 %v939, %v937
        %v984 = vpack.c.b16 %v940, %v938
        %v985 = vpack.c.b16 %v943, %v941
        %v986 = vpack.c.b16 %v944, %v942
        %v987 = vpack.c.b16 %v947, %v945
        %v988 = vpack.c.b16 %v948, %v946
        %v989 = vpack.c.b16 %v951, %v949
        %v990 = vpack.c.b16 %v952, %v950
        %v991 = vpack.c.b16 %v955, %v953
        %v992 = vpack.c.b16 %v956, %v954
        %v993 = vpack.c.b16 %v959, %v957
        %v994 = vpack.c.b16 %v960, %v958
        %v995 = vpack.c.b16 %v963, %v961
        %v996 = vpack.c.b16 %v964, %v962
        %1029 = vmatprep.subr.bf16.mxu0 %v966
        %1030 = vmatpush1.bf16.msra.mxu0 %v965
        %1031 = vmatprep.subr.bf16.mxu0 %v968
        %1032 = vmatpush1.bf16.msra.mxu0 %v967
        %1033 = vmatprep.subr.bf16.mxu0 %v970
        %1034 = vmatpush1.bf16.msra.mxu0 %v969
        %1035 = vmatprep.subr.bf16.mxu0 %v972
        %1036 = vmatpush1.bf16.msra.mxu0 %v971
        %1037 = vmatprep.subr.bf16.mxu0 %v974
        %1038 = vmatpush1.bf16.msra.mxu0 %v973
        %1039 = vmatprep.subr.bf16.mxu0 %v976
        %1040 = vmatpush1.bf16.msra.mxu0 %v975
        %1041 = vmatprep.subr.bf16.mxu0 %v978
        %1042 = vmatpush1.bf16.msra.mxu0 %v977
        %1043 = vmatprep.subr.bf16.mxu0 %v980
        %1044 = vmatpush1.bf16.msra.mxu0 %v979
        %1045 = vmatprep.subr.bf16.mxu0 %v982
        %1046 = vmatpush1.bf16.msra.mxu0 %v981
        %1047 = vmatprep.subr.bf16.mxu0 %v984
        %1048 = vmatpush1.bf16.msra.mxu0 %v983
        %1049 = vmatprep.subr.bf16.mxu0 %v986
        %1050 = vmatpush1.bf16.msra.mxu0 %v985
        %1051 = vmatprep.subr.bf16.mxu0 %v988
        %1052 = vmatpush1.bf16.msra.mxu0 %v987
        %1053 = vmatprep.subr.bf16.mxu0 %v990
        %1054 = vmatpush1.bf16.msra.mxu0 %v989
        %1055 = vmatprep.subr.bf16.mxu0 %v992
        %1056 = vmatpush1.bf16.msra.mxu0 %v991
        %1057 = vmatprep.subr.bf16.mxu0 %v994
        %1058 = vmatpush1.bf16.msra.mxu0 %v993
        %1059 = vmatprep.subr.bf16.mxu0 %v996
        %1060 = vmatpush1.bf16.msra.mxu0 %v995
        %1061 = vmatprep.mubr.bf16.mxu0 %v836
        %1062 = vmatmul.mubr.bf16.gmra.mrb[0].mxu0 %v835
        %v1063 = vpop.f32.mrb[0].mxu0
        %v1064 = vadd.f32 0.0, %v1063
        %v1065 = vpop.f32.mrb[0].mxu0
        %v1066 = vadd.f32 0.0, %v1065
        %v1067 = vpop.f32.mrb[0].mxu0
        %v1068 = vadd.f32 0.0, %v1067
        %v1069 = vpop.f32.mrb[0].mxu0
        %v1070 = vadd.f32 0.0, %v1069
        %1071 = vdwg.mxu0
        %v1072 = vadd.f32 %v831, %v1064
        %v1073 = vadd.f32 %v832, %v1066
        %v1074 = vadd.f32 %v833, %v1068
        %v1075 = vadd.f32 %v834, %v1070
        %1076 = vst [vmem:[#allocation2] sm:$0xff] %v1072
        %1077 = vst [vmem:[#allocation2 + $0x8] sm:$0xff] %v1073
        %1078 = vst [vmem:[#allocation2 + $0x10] sm:$0xff] %v1074
        %1079 = vst [vmem:[#allocation2 + $0x18] sm:$0xff] %v1075
        %p1080 = scmp.eq.s32.totalorder %s30, 1
        // Predicated region
        $region49: #{tpu_custom_call.1} parent=31 // pred_check
          %p1081 = pneg %p1080
        $region50: #{tpu_custom_call.1} parent=31 // pred_check_branch
          %1083 = sbr.rel (%p1081) target = $region52
        $region51: #{tpu_custom_call.1} parent=31 // pred_region
          %v1084 = vld [vmem:[#allocation2] sm:$0xff]
          %v1085 = vld [vmem:[#allocation2 + $0x8] sm:$0xff]
          %v1086 = vld [vmem:[#allocation2 + $0x10] sm:$0xff]
          %v1087 = vld [vmem:[#allocation2 + $0x18] sm:$0xff]
          %v1088 = vpack.c.bf16 %v1086, %v1084
          %v1089 = vpack.c.bf16 %v1087, %v1085
          %v1092 = vunpack.c.l.b16 %v1088
          %v1093 = vunpack.c.l.b16 %v1089
          %v1094 = vunpack.c.h.b16 %v1088
          %v1095 = vunpack.c.h.b16 %v1089
          %v1096 = vpack.c.b16 %v1093, %v1092
          %v1097 = vpack.c.b16 %v1095, %v1094
          %1100 = vst [vmem:[%s300] sm:$0xff] %v1096
          %1101 = vst [vmem:[%s300 + $0x8] sm:$0xff] %v1097
        $region52: #{tpu_custom_call.1} parent=31 // pred_fallthru
          _
        %s1102 = sand.u32 %s138, 1
        %s1103 = scalar_lea.sflag [#allocation5], %s1102
        %s1104 = sand.u32 %s138, 1
        %s1105 = smul.addr %s1104, 16
        %s1106 = scalar_lea.vmem [#allocation9], %s1105
        // Predicated region
        $region53: #{tpu_custom_call.1} parent=31 // pred_check
          %p1107 = pneg %p148
        $region54: #{tpu_custom_call.1} parent=31 // pred_check_branch
          %1109 = sbr.rel (%p1107) target = $region56
        $region55: #{tpu_custom_call.1} parent=31 // pred_region
          %s1110 = smul.u32 2, %s29
          %s1112 = ssub.s32 256, 256
          %1113 = vsyncadd %s1103, %s1112
          %s1114 = smul.addr %s1110, 2
          %s1115 = smul.addr %s28, 8
          %s1116 = sadd.s32 %s1114, %s1115
          %s1117 = smul.addr %s1116, 64
          %s1118 = scalar_lea.hbm %s3, %s1117
          %s1119 = sshll.u32 %s1106, 4
          %s1120 = int_to_ptr.vmem [resolvable:$true] %s1119
          %1125 = dma.vmem_to_hbm [thread:$0]  %s1120, 256, %s1118, %s1103, 128, 128, 8
        $region56: #{tpu_custom_call.1} parent=31 // pred_fallthru
          _
      $region32: #{tpu_custom_call.1} parent=5 // pred_fallthru
        _
      %p1126 = scmp.le.s32.totalorder 2, %s18
      // Predicated region
      $region57: #{tpu_custom_call.1} parent=5 // pred_check
        %p1127 = pneg %p1126
      $region58: #{tpu_custom_call.1} parent=5 // pred_check_branch
        %1129 = sbr.rel (%p1127) target = $region60
      $region59: #{tpu_custom_call.1} parent=5 // pred_region
        %s1130 = ssub.s32 %s18, 2
        // Predicated region
        $region61: #{tpu_custom_call.1} parent=59 // pred_check
          %p1131 = pneg %p154
        $region62: #{tpu_custom_call.1} parent=59 // pred_check_branch
          %1133 = sbr.rel (%p1131) target = $region64
        $region63: #{tpu_custom_call.1} parent=59 // pred_region
          %s1134 = sand.u32 %s139, 1
          %s1135 = scalar_lea.sflag [#allocation5], %s1134
          %s1136 = sand.u32 %s139, 1
          %s1137 = smul.addr %s1136, 16
          %s1138 = scalar_lea.vmem [#allocation9], %s1137
          %1139 = dma.done %s1135, 256
        $region64: #{tpu_custom_call.1} parent=59 // pred_fallthru
          _
      $region60: #{tpu_custom_call.1} parent=5 // pred_fallthru
        _
    $region6: #{tpu_custom_call.1} parent=1 // loop_footer
      %s22 = sadd.s32 1, %s18
    $region7: #{tpu_custom_call.1} parent=1 // loop_footer_branch
      %17 = sbr.rel target = $region3
    $region8: #{tpu_custom_call.1} parent=1 // loop_exit
      _
    %1140 = vsyncpa [#allocation4], 1
    %s1141 = scalar_lea.sflag [#allocation4], 1
    %1142 = vsyncpa %s1141, 1
    %1143 = vsyncpa [#allocation7], 1
    %s1144 = scalar_lea.sflag [#allocation7], 1
    %1145 = vsyncpa %s1144, 1
    %1146 = vsyncpa [#allocation5], 1
    %s1147 = scalar_lea.sflag [#allocation5], 1
    %1148 = vsyncpa %s1147, 1

</llo_original>
